<compile_context>
chip_gen: v7x
topology: tpu7x:2x2x1
jax: 0.10.0
libtpu: 0.0.40
codegen_flags: <defaults>
</compile_context>

<pallas_src>
import jax
import jax.numpy as jnp
from jax.experimental import pallas as pl
from jax.experimental.pallas import tpu as pltpu

LANE = 128
SUBLANE_BF16 = 16   # bf16 packs 16 rows per vreg sublane group


def _round_up(n, m):
    return ((n + m - 1) // m) * m


def _device_kind():
    try:
        return jax.devices()[0].device_kind.lower()
    except Exception:
        return ""


def _vmem_budget_bytes():
    # Default scoped-VMEM: 16 MiB on v5e, 32 MiB on v6e/v7x.  We budget inside
    # the default so no vmem_limit_bytes override is needed.
    kind = _device_kind()
    return (16 << 20) if "v5" in kind else (32 << 20)


def _num_tensorcores():
    # v7x has 2 TensorCores per chip; v5e/v6e have 1.  Fallback: 1.
    return 2 if "v7" in _device_kind() else 1


def _pick_tm(batch, k1, d1, d2, n_pad):
    """Largest batch tile (multiple of 16) whose working set fits the VMEM budget."""
    # Resident weights/biases (double-buffered input specs, hence the 2x).
    weight_bytes = 2 * ((k1 * d1 + d1 * d2 + d2 * n_pad) * 2   # bf16 weights
                        + (d1 + d2 + n_pad) * 4)               # f32 biases

    def step_bytes(tm):
        return (2 * tm * k1 * 4          # x tile, f32, double-buffered
                + 2 * tm * n_pad * 4     # out tile, f32, double-buffered
                + tm * (d1 + d2) * 4)    # h1 / h2 f32 intermediates

    avail = int(0.75 * _vmem_budget_bytes()) - weight_bytes
    tm = SUBLANE_BF16
    for cand in (16, 32, 64, 128, 256, 512, 1024, 2048):
        if step_bytes(cand) <= avail:
            tm = cand
    # 2-TC chips: guarantee the "parallel" batch axis has at least 2 grid steps.
    if _num_tensorcores() >= 2 and batch >= 2 * SUBLANE_BF16:
        tm = min(tm, max(SUBLANE_BF16, _round_up(pl.cdiv(batch, 2), SUBLANE_BF16)))
    if batch <= tm:
        tm = batch                       # single block spanning the full batch
    return tm


def ffnn_kernel(x_ref, w1_ref, b1_ref, w2_ref, b2_ref, w3_ref, b3_ref, o_ref):
    # fc1 + relu (dropout = identity in eval mode).  x arrives f32 and is cast
    # to bf16 on the VPU (a free slot under the MXU) right before the dot.
    x = x_ref[...].astype(w1_ref.dtype)
    h1 = jnp.dot(x, w1_ref[...], preferred_element_type=jnp.float32)
    h1 = jnp.maximum(h1 + b1_ref[...], 0.0)

    # fc2 + relu
    h2 = jnp.dot(h1.astype(w2_ref.dtype), w2_ref[...],
                 preferred_element_type=jnp.float32)
    h2 = jnp.maximum(h2 + b2_ref[...], 0.0)

    # fc3 — output columns are lane-padded; padded weight/bias columns are zero.
    out = jnp.dot(h2.astype(w3_ref.dtype), w3_ref[...],
                  preferred_element_type=jnp.float32)
    o_ref[...] = (out + b3_ref[...]).astype(o_ref.dtype)


def ffnn_forward(x, params, compute_dtype=jnp.bfloat16):
    """x: (batch, seq_len, input_dim) float32. Returns (batch, output_dim) f32."""
    w1, b1, w2, b2, w3, b3 = params
    batch = x.shape[0]
    x_flat = x.reshape(batch, -1)                 # torch: x.view(x.size(0), -1)
    k1 = x_flat.shape[1]
    out_dim = w3.shape[1]
    d1, d2 = w1.shape[1], w2.shape[1]

    # fc1 K-dim lane alignment (no-op when k1 is already a multiple of 128).
    k1p = _round_up(k1, LANE)
    if k1p != k1:
        x_flat = jnp.pad(x_flat, ((0, 0), (0, k1p - k1)))
        w1 = jnp.pad(w1, ((0, k1p - k1), (0, 0)))
        k1 = k1p

    # Lane-dense output store: pad fc3 columns to a multiple of 128 with zeros.
    n_pad = _round_up(out_dim, LANE)
    if n_pad != out_dim:
        w3 = jnp.pad(w3, ((0, 0), (0, n_pad - out_dim)))
        b3 = jnp.pad(b3, ((0, 0), (0, n_pad - out_dim)))

    # bf16 weights (half the resident-weight DMA, native MXU path); f32 biases.
    w1c, w2c, w3c = (w.astype(compute_dtype) for w in (w1, w2, w3))
    b1c, b2c, b3c = (b.astype(jnp.float32) for b in (b1, b2, b3))

    tm = _pick_tm(batch, k1, d1, d2, n_pad)
    grid = pl.cdiv(batch, tm)            # ragged last block is handled by Pallas

    cost = pl.CostEstimate(
        flops=2 * batch * (k1 * d1 + d1 * d2 + d2 * n_pad),
        transcendentals=0,
        bytes_accessed=int(
            x_flat.size * 4
            + sum(a.size * a.dtype.itemsize
                  for a in (w1c, b1c, w2c, b2c, w3c, b3c))
            + batch * n_pad * 4),
    )

    const = lambda shape: pl.BlockSpec(shape, lambda i: (0, 0))

    out_padded = pl.pallas_call(
        ffnn_kernel,
        out_shape=jax.ShapeDtypeStruct((batch, n_pad), jnp.float32),
        grid_spec=pltpu.PrefetchScalarGridSpec(
            num_scalar_prefetch=0,
            grid=(grid,),
            in_specs=[
                pl.BlockSpec((tm, k1), lambda i: (i, 0)),    # x batch tile (f32)
                const(w1c.shape), const(b1c.shape),          # weights resident
                const(w2c.shape), const(b2c.shape),
                const(w3c.shape), const(b3c.shape),
            ],
            out_specs=pl.BlockSpec((tm, n_pad), lambda i: (i, 0)),
        ),
        compiler_params=pltpu.CompilerParams(
            dimension_semantics=("parallel",),   # shards batch tiles across TCs
        ),
        cost_estimate=cost,
    )(x_flat, w1c, b1c, w2c, b2c, w3c, b3c)

    return out_padded[:, :out_dim]


def _reference(x, params, compute_dtype=jnp.bfloat16):
    """Pure-JAX reference with the same bf16 quantization / f32 accumulation."""
    w1, b1, w2, b2, w3, b3 = params
    xb = x.reshape(x.shape[0], -1).astype(compute_dtype)
    w1b, w2b, w3b = (w.astype(compute_dtype) for w in (w1, w2, w3))
    h = jnp.maximum(jnp.dot(xb, w1b, preferred_element_type=jnp.float32) + b1, 0.0)
    h = jnp.maximum(jnp.dot(h.astype(compute_dtype), w2b,
                            preferred_element_type=jnp.float32) + b2, 0.0)
    return jnp.dot(h.astype(compute_dtype), w3b,
                   preferred_element_type=jnp.float32) + b3


def init_params(key, input_dim, output_dim, seq_len):
    """Deterministic init mimicking nn.Linear's uniform(-1/sqrt(fan_in), 1/sqrt(fan_in))."""
    dims = [(input_dim * seq_len, 512), (512, 256), (256, output_dim)]
    params = []
    for fan_in, fan_out in dims:
        key, kw, kb = jax.random.split(key, 3)
        bound = 1.0 / jnp.sqrt(fan_in)
        w = jax.random.uniform(kw, (fan_in, fan_out), jnp.float32, -bound, bound)
        b = jax.random.uniform(kb, (1, fan_out), jnp.float32, -bound, bound)
        params += [w, b]
    return tuple(params)


if __name__ == "__main__":
    # Small shapes consistent with the module: seq_len=8, input_dim=16, out=10.
    seq_len, input_dim, output_dim = 8, 16, 10

    key = jax.random.PRNGKey(0)
    key, kp = jax.random.split(key)
    params = init_params(kp, input_dim, output_dim, seq_len)

    # batch=2: tiny, single block.  batch=40: exercises the tiled/ragged grid
    # path on 2-TC chips (v7x) while staying a single block elsewhere.
    for batch in (2, 40):
        key, kx = jax.random.split(key)
        x = jax.random.normal(kx, (batch, seq_len, input_dim), dtype=jnp.float32)

        out = jax.block_until_ready(ffnn_forward(x, params))
        ref = _reference(x, params)

        assert out.shape == (batch, output_dim)
        assert jnp.allclose(out, ref, atol=2e-3, rtol=2e-3), (
            f"mismatch for batch={batch}: "
            f"max abs err {jnp.max(jnp.abs(out - ref)):.2e}")

    print("KERNEL_OK")
</pallas_src>

<mosaic_0001>
module attributes {stable_mosaic.version = 11 : i64} {
  func.func @ffnn_kernel(%arg0: i32, %arg1: memref<2x128xf32, #tpu.memory_space<vmem>>, %arg2: memref<128x512xbf16, #tpu.memory_space<vmem>>, %arg3: memref<1x512xf32, #tpu.memory_space<vmem>>, %arg4: memref<512x256xbf16, #tpu.memory_space<vmem>>, %arg5: memref<1x256xf32, #tpu.memory_space<vmem>>, %arg6: memref<256x128xbf16, #tpu.memory_space<vmem>>, %arg7: memref<1x128xf32, #tpu.memory_space<vmem>>, %arg8: memref<2x128xf32, #tpu.memory_space<vmem>>) attributes {dimension_semantics = [#tpu.dimension_semantics<parallel>], iteration_bounds = array<i64: 1>, scalar_prefetch = 0 : i64, scratch_operands = 0 : i64, tpu.core_type = #tpu.core_type<tc>, window_params = [{transform_indices = @transform_0, window_bounds = array<i64: 2, 128>}, {pipeline_mode = #tpu.pipeline_mode<synchronous>, transform_indices = @transform_1, window_bounds = array<i64: 128, 512>}, {pipeline_mode = #tpu.pipeline_mode<synchronous>, transform_indices = @transform_2, window_bounds = array<i64: 1, 512>}, {pipeline_mode = #tpu.pipeline_mode<synchronous>, transform_indices = @transform_3, window_bounds = array<i64: 512, 256>}, {pipeline_mode = #tpu.pipeline_mode<synchronous>, transform_indices = @transform_4, window_bounds = array<i64: 1, 256>}, {pipeline_mode = #tpu.pipeline_mode<synchronous>, transform_indices = @transform_5, window_bounds = array<i64: 256, 128>}, {pipeline_mode = #tpu.pipeline_mode<synchronous>, transform_indices = @transform_6, window_bounds = array<i64: 1, 128>}, {transform_indices = @transform_7, window_bounds = array<i64: 2, 128>}]} {
    %c0 = arith.constant 0 : index
    %c0_0 = arith.constant 0 : index
    %0 = vector.load %arg1[%c0, %c0_0] : memref<2x128xf32, #tpu.memory_space<vmem>>, vector<2x128xf32>
    %1 = arith.truncf %0 : vector<2x128xf32> to vector<2x128xbf16>
    %c0_1 = arith.constant 0 : index
    %c0_2 = arith.constant 0 : index
    %2 = vector.load %arg2[%c0_1, %c0_2] : memref<128x512xbf16, #tpu.memory_space<vmem>>, vector<128x512xbf16>
    %cst = arith.constant dense<0.000000e+00> : vector<2x512xf32>
    %3 = tpu.matmul %1, %2, %cst {dimension_numbers = #tpu.dot_dimension_numbers<[1], [0], [0], [1], [0, 0, 1, 1], [], []>} : vector<2x128xbf16>, vector<128x512xbf16>, vector<2x512xf32> -> vector<2x512xf32>
    %c0_3 = arith.constant 0 : index
    %c0_4 = arith.constant 0 : index
    %4 = vector.load %arg3[%c0_3, %c0_4] : memref<1x512xf32, #tpu.memory_space<vmem>>, vector<1x512xf32>
    %5 = vector.broadcast %4 : vector<1x512xf32> to vector<2x512xf32>
    %6 = arith.addf %3, %5 : vector<2x512xf32>
    %cst_5 = arith.constant 0.000000e+00 : f32
    %7 = vector.broadcast %cst_5 : f32 to vector<2x512xf32>
    %8 = arith.maximumf %6, %7 : vector<2x512xf32>
    %9 = arith.truncf %8 : vector<2x512xf32> to vector<2x512xbf16>
    %c0_6 = arith.constant 0 : index
    %c0_7 = arith.constant 0 : index
    %10 = vector.load %arg4[%c0_6, %c0_7] : memref<512x256xbf16, #tpu.memory_space<vmem>>, vector<512x256xbf16>
    %cst_8 = arith.constant dense<0.000000e+00> : vector<2x256xf32>
    %11 = tpu.matmul %9, %10, %cst_8 {dimension_numbers = #tpu.dot_dimension_numbers<[1], [0], [0], [1], [0, 0, 1, 1], [], []>} : vector<2x512xbf16>, vector<512x256xbf16>, vector<2x256xf32> -> vector<2x256xf32>
    %c0_9 = arith.constant 0 : index
    %c0_10 = arith.constant 0 : index
    %12 = vector.load %arg5[%c0_9, %c0_10] : memref<1x256xf32, #tpu.memory_space<vmem>>, vector<1x256xf32>
    %13 = vector.broadcast %12 : vector<1x256xf32> to vector<2x256xf32>
    %14 = arith.addf %11, %13 : vector<2x256xf32>
    %cst_11 = arith.constant 0.000000e+00 : f32
    %15 = vector.broadcast %cst_11 : f32 to vector<2x256xf32>
    %16 = arith.maximumf %14, %15 : vector<2x256xf32>
    %17 = arith.truncf %16 : vector<2x256xf32> to vector<2x256xbf16>
    %c0_12 = arith.constant 0 : index
    %c0_13 = arith.constant 0 : index
    %18 = vector.load %arg6[%c0_12, %c0_13] : memref<256x128xbf16, #tpu.memory_space<vmem>>, vector<256x128xbf16>
    %cst_14 = arith.constant dense<0.000000e+00> : vector<2x128xf32>
    %19 = tpu.matmul %17, %18, %cst_14 {dimension_numbers = #tpu.dot_dimension_numbers<[1], [0], [0], [1], [0, 0, 1, 1], [], []>} : vector<2x256xbf16>, vector<256x128xbf16>, vector<2x128xf32> -> vector<2x128xf32>
    %c0_15 = arith.constant 0 : index
    %c0_16 = arith.constant 0 : index
    %20 = vector.load %arg7[%c0_15, %c0_16] : memref<1x128xf32, #tpu.memory_space<vmem>>, vector<1x128xf32>
    %21 = vector.broadcast %20 : vector<1x128xf32> to vector<2x128xf32>
    %22 = arith.addf %19, %21 : vector<2x128xf32>
    %c0_17 = arith.constant 0 : index
    %c0_18 = arith.constant 0 : index
    %23 = vector.load %arg8[%c0_17, %c0_18] : memref<2x128xf32, #tpu.memory_space<vmem>>, vector<2x128xf32>
    tpu.vector_store %arg8[%c0_17, %c0_18], %22 {strides = array<i32>} : memref<2x128xf32, #tpu.memory_space<vmem>>, vector<2x128xf32>,
    return
  }
  func.func @transform_0(%arg0: i32) -> (i32, i32) {
    %c0_i32 = arith.constant 0 : i32
    %c0_i32_0 = arith.constant 0 : i32
    return %arg0, %c0_i32 : i32, i32
  }
  func.func @transform_1(%arg0: i32) -> (i32, i32) {
    %c0_i32 = arith.constant 0 : i32
    %c0_i32_0 = arith.constant 0 : i32
    %c0_i32_1 = arith.constant 0 : i32
    return %c0_i32, %c0_i32_0 : i32, i32
  }
  func.func @transform_2(%arg0: i32) -> (i32, i32) {
    %c0_i32 = arith.constant 0 : i32
    %c0_i32_0 = arith.constant 0 : i32
    %c0_i32_1 = arith.constant 0 : i32
    return %c0_i32, %c0_i32_0 : i32, i32
  }
  func.func @transform_3(%arg0: i32) -> (i32, i32) {
    %c0_i32 = arith.constant 0 : i32
    %c0_i32_0 = arith.constant 0 : i32
    %c0_i32_1 = arith.constant 0 : i32
    return %c0_i32, %c0_i32_0 : i32, i32
  }
  func.func @transform_4(%arg0: i32) -> (i32, i32) {
    %c0_i32 = arith.constant 0 : i32
    %c0_i32_0 = arith.constant 0 : i32
    %c0_i32_1 = arith.constant 0 : i32
    return %c0_i32, %c0_i32_0 : i32, i32
  }
  func.func @transform_5(%arg0: i32) -> (i32, i32) {
    %c0_i32 = arith.constant 0 : i32
    %c0_i32_0 = arith.constant 0 : i32
    %c0_i32_1 = arith.constant 0 : i32
    return %c0_i32, %c0_i32_0 : i32, i32
  }
  func.func @transform_6(%arg0: i32) -> (i32, i32) {
    %c0_i32 = arith.constant 0 : i32
    %c0_i32_0 = arith.constant 0 : i32
    %c0_i32_1 = arith.constant 0 : i32
    return %c0_i32, %c0_i32_0 : i32, i32
  }
  func.func @transform_7(%arg0: i32) -> (i32, i32) {
    %c0_i32 = arith.constant 0 : i32
    %c0_i32_0 = arith.constant 0 : i32
    return %arg0, %c0_i32 : i32, i32
  }
}

</mosaic_0001>

<llo_original>
// kernel: tpu_custom_call.1
$region0: #{tpu_custom_call.1}
  #allocation0 [shape = 'u32[]', space=smem, size = 0x4, offset = 0x4, fixed_abs, tag = 'smem constant byte address 0x4 - core index']
  #allocation1 [shape = 'u32[144,128]{1,0:T(1,128)}', space=vmem, size = 0x12000, scoped, tag = 'internal scratch']
  %s0 = inlined_call_operand.hbm [shape: f32[2,128], index: 0, kind: input, shape index: {}]
  %s1 = inlined_call_operand.hbm [shape: bf16[128,512], index: 1, kind: input, shape index: {}]
  %s2 = inlined_call_operand.vmem [shape: f32[1,512], index: 2, kind: input, shape index: {}]
  %s3 = inlined_call_operand.hbm [shape: bf16[512,256], index: 3, kind: input, shape index: {}]
  %s4 = inlined_call_operand.vmem [shape: f32[1,256], index: 4, kind: input, shape index: {}]
  %s5 = inlined_call_operand.hbm [shape: bf16[256,128], index: 5, kind: input, shape index: {}]
  %s6 = inlined_call_operand.vmem [shape: f32[1,128], index: 6, kind: input, shape index: {}]
  %s7 = inlined_call_operand.hbm [shape: f32[2,128], index: 7, kind: output, shape index: {}]
  %s8 = sld [smem:[#allocation0]]
  $region54: #{tpu_custom_call.1} parent=0
    _
  %s10 = ssub.s32 1, %s8
  %s11 = scalar_select 0, %s10, %s8
  $region1: #{tpu_custom_call.1} parent=0
    #allocation2 [shape = 'u8[1024]{0}', space=vmem, size = 0x400, scoped, tag = 'input window, operand 0, single buffered']
    #allocation3 [shape = 's32[1]{0}', space=sflag, size = 0x4, scoped, tag = 'scoped memory for tpu_custom_call.1']
    #allocation4 [shape = 's32[1]{0}', space=sflag, size = 0x4, scoped, tag = 'scoped memory for tpu_custom_call.1']
    #allocation5 [shape = 'u8[131072]{0}', space=vmem, size = 0x20000, scoped, tag = 'input window, operand 1, single buffered']
    #allocation6 [shape = 's32[1]{0}', space=sflag, size = 0x4, scoped, tag = 'scoped memory for tpu_custom_call.1']
    #allocation7 [shape = 'u8[262144]{0}', space=vmem, size = 0x40000, scoped, tag = 'input window, operand 3, single buffered']
    #allocation8 [shape = 'u8[65536]{0}', space=vmem, size = 0x10000, scoped, tag = 'input window, operand 5, single buffered']
    #allocation9 [shape = 's32[1]{0}', space=sflag, size = 0x4, scoped, tag = 'scoped memory for tpu_custom_call.1']
    #allocation10 [shape = 'u8[1024]{0}', space=vmem, size = 0x400, scoped, tag = 'output window, operand 0, single buffered']
    %12 = vsyncpa [#allocation3], 0
    %13 = vsyncpa [#allocation6], 0
    %14 = vsyncpa [#allocation9], 0
    %15 = vsyncpa [#allocation4], 0
    // Predicated region
    $region2: #{tpu_custom_call.1} parent=1 // pred_check
      _
    $region3: #{tpu_custom_call.1} parent=1 // pred_check_branch
      %17 = sbr.rel (0) target = $region5
    $region4: #{tpu_custom_call.1} parent=1 // pred_region
      %s19 = ssub.s32 32, 32
      %20 = vsyncadd [#allocation3], %s19
      %s22 = sshll.u32 [#allocation2], 4
      %s23 = int_to_ptr.vmem [resolvable:$true] %s22
      %25 = dma.hbm_to_vmem [thread:$0]  %s0, 32, %s23, [#allocation3]
    $region5: #{tpu_custom_call.1} parent=1 // pred_fallthru
      _
    // Predicated region
    $region6: #{tpu_custom_call.1} parent=1 // pred_check
      _
    $region7: #{tpu_custom_call.1} parent=1 // pred_check_branch
      %27 = sbr.rel (0) target = $region9
    $region8: #{tpu_custom_call.1} parent=1 // pred_region
      %s29 = ssub.s32 4096, 4096
      %30 = vsyncadd [#allocation6], %s29
      %s31 = sshll.u32 [#allocation5], 4
      %s32 = int_to_ptr.vmem [resolvable:$true] %s31
      %37 = dma.hbm_to_vmem [thread:$0]  %s1, 4096, %s32, [#allocation6], 256, 256, 16
    $region9: #{tpu_custom_call.1} parent=1 // pred_fallthru
      _
    // Predicated region
    $region10: #{tpu_custom_call.1} parent=1 // pred_check
      _
    $region11: #{tpu_custom_call.1} parent=1 // pred_check_branch
      %39 = sbr.rel (0) target = $region13
    $region12: #{tpu_custom_call.1} parent=1 // pred_region
      _
    $region13: #{tpu_custom_call.1} parent=1 // pred_fallthru
      _
    // Predicated region
    $region14: #{tpu_custom_call.1} parent=1 // pred_check
      _
    $region15: #{tpu_custom_call.1} parent=1 // pred_check_branch
      %41 = sbr.rel (0) target = $region17
    $region16: #{tpu_custom_call.1} parent=1 // pred_region
      %s43 = ssub.s32 8192, 8192
      %44 = vsyncadd [#allocation6], %s43
      %s45 = sshll.u32 [#allocation7], 4
      %s46 = int_to_ptr.vmem [resolvable:$true] %s45
      %51 = dma.hbm_to_vmem [thread:$0]  %s3, 8192, %s46, [#allocation6], 128, 128, 8
    $region17: #{tpu_custom_call.1} parent=1 // pred_fallthru
      _
    // Predicated region
    $region18: #{tpu_custom_call.1} parent=1 // pred_check
      _
    $region19: #{tpu_custom_call.1} parent=1 // pred_check_branch
      %53 = sbr.rel (0) target = $region21
    $region20: #{tpu_custom_call.1} parent=1 // pred_region
      _
    $region21: #{tpu_custom_call.1} parent=1 // pred_fallthru
      _
    // Predicated region
    $region22: #{tpu_custom_call.1} parent=1 // pred_check
      _
    $region23: #{tpu_custom_call.1} parent=1 // pred_check_branch
      %55 = sbr.rel (0) target = $region25
    $region24: #{tpu_custom_call.1} parent=1 // pred_region
      %s57 = ssub.s32 2048, 2048
      %58 = vsyncadd [#allocation9], %s57
      %s59 = sshll.u32 [#allocation8], 4
      %s60 = int_to_ptr.vmem [resolvable:$true] %s59
      %65 = dma.hbm_to_vmem [thread:$0]  %s5, 2048, %s60, [#allocation9], 64, 64, 4
    $region25: #{tpu_custom_call.1} parent=1 // pred_fallthru
      _
    // Predicated region
    $region26: #{tpu_custom_call.1} parent=1 // pred_check
      _
    $region27: #{tpu_custom_call.1} parent=1 // pred_check_branch
      %67 = sbr.rel (0) target = $region29
    $region28: #{tpu_custom_call.1} parent=1 // pred_region
      _
    $region29: #{tpu_custom_call.1} parent=1 // pred_fallthru
      _
    // Predicated region
    $region30: #{tpu_custom_call.1} parent=1 // pred_check
      _
    $region31: #{tpu_custom_call.1} parent=1 // pred_check_branch
      %69 = sbr.rel (0) target = $region33
    $region32: #{tpu_custom_call.1} parent=1 // pred_region
      %70 = dma.done [#allocation3], 32
    $region33: #{tpu_custom_call.1} parent=1 // pred_fallthru
      _
    // Predicated region
    $region34: #{tpu_custom_call.1} parent=1 // pred_check
      _
    $region35: #{tpu_custom_call.1} parent=1 // pred_check_branch
      %72 = sbr.rel (0) target = $region37
    $region36: #{tpu_custom_call.1} parent=1 // pred_region
      %73 = dma.done [#allocation6], 4096
    $region37: #{tpu_custom_call.1} parent=1 // pred_fallthru
      _
    // Predicated region
    $region38: #{tpu_custom_call.1} parent=1 // pred_check
      _
    $region39: #{tpu_custom_call.1} parent=1 // pred_check_branch
      %75 = sbr.rel (0) target = $region41
    $region40: #{tpu_custom_call.1} parent=1 // pred_region
      %76 = dma.done [#allocation6], 8192
    $region41: #{tpu_custom_call.1} parent=1 // pred_fallthru
      _
    // Predicated region
    $region42: #{tpu_custom_call.1} parent=1 // pred_check
      _
    $region43: #{tpu_custom_call.1} parent=1 // pred_check_branch
      %78 = sbr.rel (0) target = $region45
    $region44: #{tpu_custom_call.1} parent=1 // pred_region
      %79 = dma.done [#allocation9], 2048
    $region45: #{tpu_custom_call.1} parent=1 // pred_fallthru
      _
    %v81 = vld [vmem:[#allocation2] sm:$0x3]
    %v82 = vpack.c.bf16 %v81, %v81
    %v83 = vld [vmem:[#allocation5] sm:$0xff]
    %v84 = vld [vmem:[#allocation5 + $0x8] sm:$0xff]
    %v85 = vld [vmem:[#allocation5 + $0x10] sm:$0xff]
    %v86 = vld [vmem:[#allocation5 + $0x18] sm:$0xff]
    %v87 = vld [vmem:[#allocation5 + $0x20] sm:$0xff]
    %v88 = vld [vmem:[#allocation5 + $0x28] sm:$0xff]
    %v89 = vld [vmem:[#allocation5 + $0x30] sm:$0xff]
    %v90 = vld [vmem:[#allocation5 + $0x38] sm:$0xff]
    %v91 = vld [vmem:[#allocation5 + $0x40] sm:$0xff]
    %v92 = vld [vmem:[#allocation5 + $0x48] sm:$0xff]
    %v93 = vld [vmem:[#allocation5 + $0x50] sm:$0xff]
    %v94 = vld [vmem:[#allocation5 + $0x58] sm:$0xff]
    %v95 = vld [vmem:[#allocation5 + $0x60] sm:$0xff]
    %v96 = vld [vmem:[#allocation5 + $0x68] sm:$0xff]
    %v97 = vld [vmem:[#allocation5 + $0x70] sm:$0xff]
    %v98 = vld [vmem:[#allocation5 + $0x78] sm:$0xff]
    %v99 = vld [vmem:[#allocation5 + $0x80] sm:$0xff]
    %v100 = vld [vmem:[#allocation5 + $0x88] sm:$0xff]
    %v101 = vld [vmem:[#allocation5 + $0x90] sm:$0xff]
    %v102 = vld [vmem:[#allocation5 + $0x98] sm:$0xff]
    %v103 = vld [vmem:[#allocation5 + $0xa0] sm:$0xff]
    %v104 = vld [vmem:[#allocation5 + $0xa8] sm:$0xff]
    %v105 = vld [vmem:[#allocation5 + $0xb0] sm:$0xff]
    %v106 = vld [vmem:[#allocation5 + $0xb8] sm:$0xff]
    %v107 = vld [vmem:[#allocation5 + $0xc0] sm:$0xff]
    %v108 = vld [vmem:[#allocation5 + $0xc8] sm:$0xff]
    %v109 = vld [vmem:[#allocation5 + $0xd0] sm:$0xff]
    %v110 = vld [vmem:[#allocation5 + $0xd8] sm:$0xff]
    %v111 = vld [vmem:[#allocation5 + $0xe0] sm:$0xff]
    %v112 = vld [vmem:[#allocation5 + $0xe8] sm:$0xff]
    %v113 = vld [vmem:[#allocation5 + $0xf0] sm:$0xff]
    %v114 = vld [vmem:[#allocation5 + $0xf8] sm:$0xff]
    %v115 = vld [vmem:[%s2] sm:$0xf]
    %v117 = vlaneseq
    %v118 = vshrl.u32 %v117, 7
    %v119 = vsub.s32 0, %v118
    %v120 = vrot.slane %v115, %v119
    %v121 = vlaneseq
    %v122 = vshrl.u32 %v121, 7
    %v123 = vsub.s32 1, %v122
    %v124 = vrot.slane %v115, %v123
    %v125 = vlaneseq
    %v126 = vshrl.u32 %v125, 7
    %v127 = vsub.s32 2, %v126
    %v128 = vrot.slane %v115, %v127
    %v129 = vlaneseq
    %v130 = vshrl.u32 %v129, 7
    %v131 = vsub.s32 3, %v130
    %v132 = vrot.slane %v115, %v131
    %v169 = vunpack.c.l.b16 %v83
    %v170 = vunpack.c.h.b16 %v83
    %v171 = vunpack.c.l.b16 %v84
    %v172 = vunpack.c.h.b16 %v84
    %v173 = vunpack.c.l.b16 %v85
    %v174 = vunpack.c.h.b16 %v85
    %v175 = vunpack.c.l.b16 %v86
    %v176 = vunpack.c.h.b16 %v86
    %v177 = vunpack.c.l.b16 %v87
    %v178 = vunpack.c.h.b16 %v87
    %v179 = vunpack.c.l.b16 %v88
    %v180 = vunpack.c.h.b16 %v88
    %v181 = vunpack.c.l.b16 %v89
    %v182 = vunpack.c.h.b16 %v89
    %v183 = vunpack.c.l.b16 %v90
    %v184 = vunpack.c.h.b16 %v90
    %v185 = vunpack.c.l.b16 %v91
    %v186 = vunpack.c.h.b16 %v91
    %v187 = vunpack.c.l.b16 %v92
    %v188 = vunpack.c.h.b16 %v92
    %v189 = vunpack.c.l.b16 %v93
    %v190 = vunpack.c.h.b16 %v93
    %v191 = vunpack.c.l.b16 %v94
    %v192 = vunpack.c.h.b16 %v94
    %v193 = vunpack.c.l.b16 %v95
    %v194 = vunpack.c.h.b16 %v95
    %v195 = vunpack.c.l.b16 %v96
    %v196 = vunpack.c.h.b16 %v96
    %v197 = vunpack.c.l.b16 %v97
    %v198 = vunpack.c.h.b16 %v97
    %v199 = vunpack.c.l.b16 %v98
    %v200 = vunpack.c.h.b16 %v98
    %v201 = vunpack.c.l.b16 %v99
    %v202 = vunpack.c.h.b16 %v99
    %v203 = vunpack.c.l.b16 %v100
    %v204 = vunpack.c.h.b16 %v100
    %v205 = vunpack.c.l.b16 %v101
    %v206 = vunpack.c.h.b16 %v101
    %v207 = vunpack.c.l.b16 %v102
    %v208 = vunpack.c.h.b16 %v102
    %v209 = vunpack.c.l.b16 %v103
    %v210 = vunpack.c.h.b16 %v103
    %v211 = vunpack.c.l.b16 %v104
    %v212 = vunpack.c.h.b16 %v104
    %v213 = vunpack.c.l.b16 %v105
    %v214 = vunpack.c.h.b16 %v105
    %v215 = vunpack.c.l.b16 %v106
    %v216 = vunpack.c.h.b16 %v106
    %v217 = vunpack.c.l.b16 %v107
    %v218 = vunpack.c.h.b16 %v107
    %v219 = vunpack.c.l.b16 %v108
    %v220 = vunpack.c.h.b16 %v108
    %v221 = vunpack.c.l.b16 %v109
    %v222 = vunpack.c.h.b16 %v109
    %v223 = vunpack.c.l.b16 %v110
    %v224 = vunpack.c.h.b16 %v110
    %v225 = vunpack.c.l.b16 %v111
    %v226 = vunpack.c.h.b16 %v111
    %v227 = vunpack.c.l.b16 %v112
    %v228 = vunpack.c.h.b16 %v112
    %v229 = vunpack.c.l.b16 %v113
    %v230 = vunpack.c.h.b16 %v113
    %v231 = vunpack.c.l.b16 %v114
    %v232 = vunpack.c.h.b16 %v114
    %v233 = vpack.c.b16 %v173, %v169
    %v234 = vpack.c.b16 %v174, %v170
    %v235 = vpack.c.b16 %v175, %v171
    %v236 = vpack.c.b16 %v176, %v172
    %v237 = vpack.c.b16 %v181, %v177
    %v238 = vpack.c.b16 %v182, %v178
    %v239 = vpack.c.b16 %v183, %v179
    %v240 = vpack.c.b16 %v184, %v180
    %v241 = vpack.c.b16 %v189, %v185
    %v242 = vpack.c.b16 %v190, %v186
    %v243 = vpack.c.b16 %v191, %v187
    %v244 = vpack.c.b16 %v192, %v188
    %v245 = vpack.c.b16 %v197, %v193
    %v246 = vpack.c.b16 %v198, %v194
    %v247 = vpack.c.b16 %v199, %v195
    %v248 = vpack.c.b16 %v200, %v196
    %v249 = vpack.c.b16 %v205, %v201
    %v250 = vpack.c.b16 %v206, %v202
    %v251 = vpack.c.b16 %v207, %v203
    %v252 = vpack.c.b16 %v208, %v204
    %v253 = vpack.c.b16 %v213, %v209
    %v254 = vpack.c.b16 %v214, %v210
    %v255 = vpack.c.b16 %v215, %v211
    %v256 = vpack.c.b16 %v216, %v212
    %v257 = vpack.c.b16 %v221, %v217
    %v258 = vpack.c.b16 %v222, %v218
    %v259 = vpack.c.b16 %v223, %v219
    %v260 = vpack.c.b16 %v224, %v220
    %v261 = vpack.c.b16 %v229, %v225
    %v262 = vpack.c.b16 %v230, %v226
    %v263 = vpack.c.b16 %v231, %v227
    %v264 = vpack.c.b16 %v232, %v228
    %297 = vmatprep.subr.bf16.mxu0 %v234
    %298 = vmatpush1.bf16.msra.mxu0 %v233
    %299 = vmatprep.subr.bf16.mxu0 %v238
    %300 = vmatpush1.bf16.msra.mxu0 %v237
    %301 = vmatprep.subr.bf16.mxu0 %v242
    %302 = vmatpush1.bf16.msra.mxu0 %v241
    %303 = vmatprep.subr.bf16.mxu0 %v246
    %304 = vmatpush1.bf16.msra.mxu0 %v245
    %305 = vmatprep.subr.bf16.mxu0 %v250
    %306 = vmatpush1.bf16.msra.mxu0 %v249
    %307 = vmatprep.subr.bf16.mxu0 %v254
    %308 = vmatpush1.bf16.msra.mxu0 %v253
    %309 = vmatprep.subr.bf16.mxu0 %v258
    %310 = vmatpush1.bf16.msra.mxu0 %v257
    %311 = vmatprep.subr.bf16.mxu0 %v262
    %312 = vmatpush1.bf16.msra.mxu0 %v261
    %313 = vmatprep.subr.bf16.mxu0 0
    %314 = vmatpush1.bf16.msra.mxu0 0
    %315 = vmatprep.subr.bf16.mxu0 0
    %316 = vmatpush1.bf16.msra.mxu0 0
    %317 = vmatprep.subr.bf16.mxu0 0
    %318 = vmatpush1.bf16.msra.mxu0 0
    %319 = vmatprep.subr.bf16.mxu0 0
    %320 = vmatpush1.bf16.msra.mxu0 0
    %321 = vmatprep.subr.bf16.mxu0 0
    %322 = vmatpush1.bf16.msra.mxu0 0
    %323 = vmatprep.subr.bf16.mxu0 0
    %324 = vmatpush1.bf16.msra.mxu0 0
    %325 = vmatprep.subr.bf16.mxu0 0
    %326 = vmatpush1.bf16.msra.mxu0 0
    %327 = vmatprep.subr.bf16.mxu0 0
    %328 = vmatpush1.bf16.msra.mxu0 0
    %329 = vmatprep.mubr.bf16.mxu0 0
    %330 = vmatmul.mubr.bf16.gmra.mrb[0].mxu0 %v82
    %v331 = vpop.f32.mrb[0].mxu0
    %v332 = vadd.f32 %v120, %v331
    %v333 = vpop.f32.mrb[0].mxu0
    %v334 = vadd.f32 %v124, %v333
    %v335 = vpop.f32.mrb[0].mxu0
    %v336 = vpop.f32.mrb[0].mxu0
    %337 = vdwg.mxu0
    %338 = vmatprep.subr.bf16.mxu0 %v236
    %339 = vmatpush1.bf16.msra.mxu0 %v235
    %340 = vmatprep.subr.bf16.mxu0 %v240
    %341 = vmatpush1.bf16.msra.mxu0 %v239
    %342 = vmatprep.subr.bf16.mxu0 %v244
    %343 = vmatpush1.bf16.msra.mxu0 %v243
    %344 = vmatprep.subr.bf16.mxu0 %v248
    %345 = vmatpush1.bf16.msra.mxu0 %v247
    %346 = vmatprep.subr.bf16.mxu0 %v252
    %347 = vmatpush1.bf16.msra.mxu0 %v251
    %348 = vmatprep.subr.bf16.mxu0 %v256
    %349 = vmatpush1.bf16.msra.mxu0 %v255
    %350 = vmatprep.subr.bf16.mxu0 %v260
    %351 = vmatpush1.bf16.msra.mxu0 %v259
    %352 = vmatprep.subr.bf16.mxu0 %v264
    %353 = vmatpush1.bf16.msra.mxu0 %v263
    %354 = vmatprep.subr.bf16.mxu0 0
    %355 = vmatpush1.bf16.msra.mxu0 0
    %356 = vmatprep.subr.bf16.mxu0 0
    %357 = vmatpush1.bf16.msra.mxu0 0
    %358 = vmatprep.subr.bf16.mxu0 0
    %359 = vmatpush1.bf16.msra.mxu0 0
    %360 = vmatprep.subr.bf16.mxu0 0
    %361 = vmatpush1.bf16.msra.mxu0 0
    %362 = vmatprep.subr.bf16.mxu0 0
    %363 = vmatpush1.bf16.msra.mxu0 0
    %364 = vmatprep.subr.bf16.mxu0 0
    %365 = vmatpush1.bf16.msra.mxu0 0
    %366 = vmatprep.subr.bf16.mxu0 0
    %367 = vmatpush1.bf16.msra.mxu0 0
    %368 = vmatprep.subr.bf16.mxu0 0
    %369 = vmatpush1.bf16.msra.mxu0 0
    %370 = vmatprep.mubr.bf16.mxu0 0
    %371 = vmatmul.mubr.bf16.gmra.mrb[0].mxu0 %v82
    %v372 = vpop.f32.mrb[0].mxu0
    %v373 = vadd.f32 %v128, %v372
    %v374 = vpop.f32.mrb[0].mxu0
    %v375 = vadd.f32 %v132, %v374
    %v376 = vpop.f32.mrb[0].mxu0
    %v377 = vpop.f32.mrb[0].mxu0
    %378 = vdwg.mxu0
    %v379 = vmax.f32 %v332, 0.0
    %v380 = vmax.f32 %v334, 0.0
    %v381 = vmax.f32 %v373, 0.0
    %v382 = vmax.f32 %v375, 0.0
    %v383 = vpack.c.bf16 %v379, %v379
    %v384 = vpack.c.bf16 %v380, %v380
    %v385 = vpack.c.bf16 %v381, %v381
    %v386 = vpack.c.bf16 %v382, %v382
    %v387 = vld [vmem:[#allocation7] sm:$0xff]
    %v388 = vld [vmem:[#allocation7 + $0x8] sm:$0xff]
    %v389 = vld [vmem:[#allocation7 + $0x10] sm:$0xff]
    %v390 = vld [vmem:[#allocation7 + $0x18] sm:$0xff]
    %v391 = vld [vmem:[#allocation7 + $0x20] sm:$0xff]
    %v392 = vld [vmem:[#allocation7 + $0x28] sm:$0xff]
    %v393 = vld [vmem:[#allocation7 + $0x30] sm:$0xff]
    %v394 = vld [vmem:[#allocation7 + $0x38] sm:$0xff]
    %v395 = vld [vmem:[#allocation7 + $0x40] sm:$0xff]
    %v396 = vld [vmem:[#allocation7 + $0x48] sm:$0xff]
    %v397 = vld [vmem:[#allocation7 + $0x50] sm:$0xff]
    %v398 = vld [vmem:[#allocation7 + $0x58] sm:$0xff]
    %v399 = vld [vmem:[#allocation7 + $0x60] sm:$0xff]
    %v400 = vld [vmem:[#allocation7 + $0x68] sm:$0xff]
    %v401 = vld [vmem:[#allocation7 + $0x70] sm:$0xff]
    %v402 = vld [vmem:[#allocation7 + $0x78] sm:$0xff]
    %v403 = vld [vmem:[#allocation7 + $0x80] sm:$0xff]
    %v404 = vld [vmem:[#allocation7 + $0x88] sm:$0xff]
    %v405 = vld [vmem:[#allocation7 + $0x90] sm:$0xff]
    %v406 = vld [vmem:[#allocation7 + $0x98] sm:$0xff]
    %v407 = vld [vmem:[#allocation7 + $0xa0] sm:$0xff]
    %v408 = vld [vmem:[#allocation7 + $0xa8] sm:$0xff]
    %v409 = vld [vmem:[#allocation7 + $0xb0] sm:$0xff]
    %v410 = vld [vmem:[#allocation7 + $0xb8] sm:$0xff]
    %v411 = vld [vmem:[#allocation7 + $0xc0] sm:$0xff]
    %v412 = vld [vmem:[#allocation7 + $0xc8] sm:$0xff]
    %v413 = vld [vmem:[#allocation7 + $0xd0] sm:$0xff]
    %v414 = vld [vmem:[#allocation7 + $0xd8] sm:$0xff]
    %v415 = vld [vmem:[#allocation7 + $0xe0] sm:$0xff]
    %v416 = vld [vmem:[#allocation7 + $0xe8] sm:$0xff]
    %v417 = vld [vmem:[#allocation7 + $0xf0] sm:$0xff]
    %v418 = vld [vmem:[#allocation7 + $0xf8] sm:$0xff]
    %v419 = vld [vmem:[#allocation7 + $0x100] sm:$0xff]
    %v420 = vld [vmem:[#allocation7 + $0x108] sm:$0xff]
    %v421 = vld [vmem:[#allocation7 + $0x110] sm:$0xff]
    %v422 = vld [vmem:[#allocation7 + $0x118] sm:$0xff]
    %v423 = vld [vmem:[#allocation7 + $0x120] sm:$0xff]
    %v424 = vld [vmem:[#allocation7 + $0x128] sm:$0xff]
    %v425 = vld [vmem:[#allocation7 + $0x130] sm:$0xff]
    %v426 = vld [vmem:[#allocation7 + $0x138] sm:$0xff]
    %v427 = vld [vmem:[#allocation7 + $0x140] sm:$0xff]
    %v428 = vld [vmem:[#allocation7 + $0x148] sm:$0xff]
    %v429 = vld [vmem:[#allocation7 + $0x150] sm:$0xff]
    %v430 = vld [vmem:[#allocation7 + $0x158] sm:$0xff]
    %v431 = vld [vmem:[#allocation7 + $0x160] sm:$0xff]
    %v432 = vld [vmem:[#allocation7 + $0x168] sm:$0xff]
    %v433 = vld [vmem:[#allocation7 + $0x170] sm:$0xff]
    %v434 = vld [vmem:[#allocation7 + $0x178] sm:$0xff]
    %v435 = vld [vmem:[#allocation7 + $0x180] sm:$0xff]
    %v436 = vld [vmem:[#allocation7 + $0x188] sm:$0xff]
    %v437 = vld [vmem:[#allocation7 + $0x190] sm:$0xff]
    %v438 = vld [vmem:[#allocation7 + $0x198] sm:$0xff]
    %v439 = vld [vmem:[#allocation7 + $0x1a0] sm:$0xff]
    %v440 = vld [vmem:[#allocation7 + $0x1a8] sm:$0xff]
    %v441 = vld [vmem:[#allocation7 + $0x1b0] sm:$0xff]
    %v442 = vld [vmem:[#allocation7 + $0x1b8] sm:$0xff]
    %v443 = vld [vmem:[#allocation7 + $0x1c0] sm:$0xff]
    %v444 = vld [vmem:[#allocation7 + $0x1c8] sm:$0xff]
    %v445 = vld [vmem:[#allocation7 + $0x1d0] sm:$0xff]
    %v446 = vld [vmem:[#allocation7 + $0x1d8] sm:$0xff]
    %v447 = vld [vmem:[#allocation7 + $0x1e0] sm:$0xff]
    %v448 = vld [vmem:[#allocation7 + $0x1e8] sm:$0xff]
    %v449 = vld [vmem:[#allocation7 + $0x1f0] sm:$0xff]
    %v450 = vld [vmem:[#allocation7 + $0x1f8] sm:$0xff]
    %v451 = vld [vmem:[%s4] sm:$0x3]
    %v453 = vlaneseq
    %v454 = vshrl.u32 %v453, 7
    %v455 = vsub.s32 0, %v454
    %v456 = vrot.slane %v451, %v455
    %v457 = vlaneseq
    %v458 = vshrl.u32 %v457, 7
    %v459 = vsub.s32 1, %v458
    %v460 = vrot.slane %v451, %v459
    %v527 = vunpack.c.l.b16 %v387
    %v528 = vunpack.c.h.b16 %v387
    %v529 = vunpack.c.l.b16 %v388
    %v530 = vunpack.c.h.b16 %v388
    %v531 = vunpack.c.l.b16 %v389
    %v532 = vunpack.c.h.b16 %v389
    %v533 = vunpack.c.l.b16 %v390
    %v534 = vunpack.c.h.b16 %v390
    %v535 = vunpack.c.l.b16 %v391
    %v536 = vunpack.c.h.b16 %v391
    %v537 = vunpack.c.l.b16 %v392
    %v538 = vunpack.c.h.b16 %v392
    %v539 = vunpack.c.l.b16 %v393
    %v540 = vunpack.c.h.b16 %v393
    %v541 = vunpack.c.l.b16 %v394
    %v542 = vunpack.c.h.b16 %v394
    %v543 = vunpack.c.l.b16 %v395
    %v544 = vunpack.c.h.b16 %v395
    %v545 = vunpack.c.l.b16 %v396
    %v546 = vunpack.c.h.b16 %v396
    %v547 = vunpack.c.l.b16 %v397
    %v548 = vunpack.c.h.b16 %v397
    %v549 = vunpack.c.l.b16 %v398
    %v550 = vunpack.c.h.b16 %v398
    %v551 = vunpack.c.l.b16 %v399
    %v552 = vunpack.c.h.b16 %v399
    %v553 = vunpack.c.l.b16 %v400
    %v554 = vunpack.c.h.b16 %v400
    %v555 = vunpack.c.l.b16 %v401
    %v556 = vunpack.c.h.b16 %v401
    %v557 = vunpack.c.l.b16 %v402
    %v558 = vunpack.c.h.b16 %v402
    %v559 = vunpack.c.l.b16 %v403
    %v560 = vunpack.c.h.b16 %v403
    %v561 = vunpack.c.l.b16 %v404
    %v562 = vunpack.c.h.b16 %v404
    %v563 = vunpack.c.l.b16 %v405
    %v564 = vunpack.c.h.b16 %v405
    %v565 = vunpack.c.l.b16 %v406
    %v566 = vunpack.c.h.b16 %v406
    %v567 = vunpack.c.l.b16 %v407
    %v568 = vunpack.c.h.b16 %v407
    %v569 = vunpack.c.l.b16 %v408
    %v570 = vunpack.c.h.b16 %v408
    %v571 = vunpack.c.l.b16 %v409
    %v572 = vunpack.c.h.b16 %v409
    %v573 = vunpack.c.l.b16 %v410
    %v574 = vunpack.c.h.b16 %v410
    %v575 = vunpack.c.l.b16 %v411
    %v576 = vunpack.c.h.b16 %v411
    %v577 = vunpack.c.l.b16 %v412
    %v578 = vunpack.c.h.b16 %v412
    %v579 = vunpack.c.l.b16 %v413
    %v580 = vunpack.c.h.b16 %v413
    %v581 = vunpack.c.l.b16 %v414
    %v582 = vunpack.c.h.b16 %v414
    %v583 = vunpack.c.l.b16 %v415
    %v584 = vunpack.c.h.b16 %v415
    %v585 = vunpack.c.l.b16 %v416
    %v586 = vunpack.c.h.b16 %v416
    %v587 = vunpack.c.l.b16 %v417
    %v588 = vunpack.c.h.b16 %v417
    %v589 = vunpack.c.l.b16 %v418
    %v590 = vunpack.c.h.b16 %v418
    %v591 = vunpack.c.l.b16 %v419
    %v592 = vunpack.c.h.b16 %v419
    %v593 = vunpack.c.l.b16 %v420
    %v594 = vunpack.c.h.b16 %v420
    %v595 = vunpack.c.l.b16 %v421
    %v596 = vunpack.c.h.b16 %v421
    %v597 = vunpack.c.l.b16 %v422
    %v598 = vunpack.c.h.b16 %v422
    %v599 = vunpack.c.l.b16 %v423
    %v600 = vunpack.c.h.b16 %v423
    %v601 = vunpack.c.l.b16 %v424
    %v602 = vunpack.c.h.b16 %v424
    %v603 = vunpack.c.l.b16 %v425
    %v604 = vunpack.c.h.b16 %v425
    %v605 = vunpack.c.l.b16 %v426
    %v606 = vunpack.c.h.b16 %v426
    %v607 = vunpack.c.l.b16 %v427
    %v608 = vunpack.c.h.b16 %v427
    %v609 = vunpack.c.l.b16 %v428
    %v610 = vunpack.c.h.b16 %v428
    %v611 = vunpack.c.l.b16 %v429
    %v612 = vunpack.c.h.b16 %v429
    %v613 = vunpack.c.l.b16 %v430
    %v614 = vunpack.c.h.b16 %v430
    %v615 = vunpack.c.l.b16 %v431
    %v616 = vunpack.c.h.b16 %v431
    %v617 = vunpack.c.l.b16 %v432
    %v618 = vunpack.c.h.b16 %v432
    %v619 = vunpack.c.l.b16 %v433
    %v620 = vunpack.c.h.b16 %v433
    %v621 = vunpack.c.l.b16 %v434
    %v622 = vunpack.c.h.b16 %v434
    %v623 = vunpack.c.l.b16 %v435
    %v624 = vunpack.c.h.b16 %v435
    %v625 = vunpack.c.l.b16 %v436
    %v626 = vunpack.c.h.b16 %v436
    %v627 = vunpack.c.l.b16 %v437
    %v628 = vunpack.c.h.b16 %v437
    %v629 = vunpack.c.l.b16 %v438
    %v630 = vunpack.c.h.b16 %v438
    %v631 = vunpack.c.l.b16 %v439
    %v632 = vunpack.c.h.b16 %v439
    %v633 = vunpack.c.l.b16 %v440
    %v634 = vunpack.c.h.b16 %v440
    %v635 = vunpack.c.l.b16 %v441
    %v636 = vunpack.c.h.b16 %v441
    %v637 = vunpack.c.l.b16 %v442
    %v638 = vunpack.c.h.b16 %v442
    %v639 = vunpack.c.l.b16 %v443
    %v640 = vunpack.c.h.b16 %v443
    %v641 = vunpack.c.l.b16 %v444
    %v642 = vunpack.c.h.b16 %v444
    %v643 = vunpack.c.l.b16 %v445
    %v644 = vunpack.c.h.b16 %v445
    %v645 = vunpack.c.l.b16 %v446
    %v646 = vunpack.c.h.b16 %v446
    %v647 = vunpack.c.l.b16 %v447
    %v648 = vunpack.c.h.b16 %v447
    %v649 = vunpack.c.l.b16 %v448
    %v650 = vunpack.c.h.b16 %v448
    %v651 = vunpack.c.l.b16 %v449
    %v652 = vunpack.c.h.b16 %v449
    %v653 = vunpack.c.l.b16 %v450
    %v654 = vunpack.c.h.b16 %v450
    %v655 = vpack.c.b16 %v529, %v527
    %v656 = vpack.c.b16 %v530, %v528
    %v657 = vpack.c.b16 %v533, %v531
    %v658 = vpack.c.b16 %v534, %v532
    %v659 = vpack.c.b16 %v537, %v535
    %v660 = vpack.c.b16 %v538, %v536
    %v661 = vpack.c.b16 %v541, %v539
    %v662 = vpack.c.b16 %v542, %v540
    %v663 = vpack.c.b16 %v545, %v543
    %v664 = vpack.c.b16 %v546, %v544
    %v665 = vpack.c.b16 %v549, %v547
    %v666 = vpack.c.b16 %v550, %v548
    %v667 = vpack.c.b16 %v553, %v551
    %v668 = vpack.c.b16 %v554, %v552
    %v669 = vpack.c.b16 %v557, %v555
    %v670 = vpack.c.b16 %v558, %v556
    %v671 = vpack.c.b16 %v561, %v559
    %v672 = vpack.c.b16 %v562, %v560
    %v673 = vpack.c.b16 %v565, %v563
    %v674 = vpack.c.b16 %v566, %v564
    %v675 = vpack.c.b16 %v569, %v567
    %v676 = vpack.c.b16 %v570, %v568
    %v677 = vpack.c.b16 %v573, %v571
    %v678 = vpack.c.b16 %v574, %v572
    %v679 = vpack.c.b16 %v577, %v575
    %v680 = vpack.c.b16 %v578, %v576
    %v681 = vpack.c.b16 %v581, %v579
    %v682 = vpack.c.b16 %v582, %v580
    %v683 = vpack.c.b16 %v585, %v583
    %v684 = vpack.c.b16 %v586, %v584
    %v685 = vpack.c.b16 %v589, %v587
    %v686 = vpack.c.b16 %v590, %v588
    %v687 = vpack.c.b16 %v593, %v591
    %v688 = vpack.c.b16 %v594, %v592
    %v689 = vpack.c.b16 %v597, %v595
    %v690 = vpack.c.b16 %v598, %v596
    %v691 = vpack.c.b16 %v601, %v599
    %v692 = vpack.c.b16 %v602, %v600
    %v693 = vpack.c.b16 %v605, %v603
    %v694 = vpack.c.b16 %v606, %v604
    %v695 = vpack.c.b16 %v609, %v607
    %v696 = vpack.c.b16 %v610, %v608
    %v697 = vpack.c.b16 %v613, %v611
    %v698 = vpack.c.b16 %v614, %v612
    %v699 = vpack.c.b16 %v617, %v615
    %v700 = vpack.c.b16 %v618, %v616
    %v701 = vpack.c.b16 %v621, %v619
    %v702 = vpack.c.b16 %v622, %v620
    %v703 = vpack.c.b16 %v625, %v623
    %v704 = vpack.c.b16 %v626, %v624
    %v705 = vpack.c.b16 %v629, %v627
    %v706 = vpack.c.b16 %v630, %v628
    %v707 = vpack.c.b16 %v633, %v631
    %v708 = vpack.c.b16 %v634, %v632
    %v709 = vpack.c.b16 %v637, %v635
    %v710 = vpack.c.b16 %v638, %v636
    %v711 = vpack.c.b16 %v641, %v639
    %v712 = vpack.c.b16 %v642, %v640
    %v713 = vpack.c.b16 %v645, %v643
    %v714 = vpack.c.b16 %v646, %v644
    %v715 = vpack.c.b16 %v649, %v647
    %v716 = vpack.c.b16 %v650, %v648
    %v717 = vpack.c.b16 %v653, %v651
    %v718 = vpack.c.b16 %v654, %v652
    %783 = vmatprep.subr.bf16.mxu0 %v656
    %784 = vmatpush1.bf16.msra.mxu0 %v655
    %785 = vmatprep.subr.bf16.mxu0 %v658
    %786 = vmatpush1.bf16.msra.mxu0 %v657
    %787 = vmatprep.subr.bf16.mxu0 %v660
    %788 = vmatpush1.bf16.msra.mxu0 %v659
    %789 = vmatprep.subr.bf16.mxu0 %v662
    %790 = vmatpush1.bf16.msra.mxu0 %v661
    %791 = vmatprep.subr.bf16.mxu0 %v664
    %792 = vmatpush1.bf16.msra.mxu0 %v663
    %793 = vmatprep.subr.bf16.mxu0 %v666
    %794 = vmatpush1.bf16.msra.mxu0 %v665
    %795 = vmatprep.subr.bf16.mxu0 %v668
    %796 = vmatpush1.bf16.msra.mxu0 %v667
    %797 = vmatprep.subr.bf16.mxu0 %v670
    %798 = vmatpush1.bf16.msra.mxu0 %v669
    %799 = vmatprep.subr.bf16.mxu0 %v672
    %800 = vmatpush1.bf16.msra.mxu0 %v671
    %801 = vmatprep.subr.bf16.mxu0 %v674
    %802 = vmatpush1.bf16.msra.mxu0 %v673
    %803 = vmatprep.subr.bf16.mxu0 %v676
    %804 = vmatpush1.bf16.msra.mxu0 %v675
    %805 = vmatprep.subr.bf16.mxu0 %v678
    %806 = vmatpush1.bf16.msra.mxu0 %v677
    %807 = vmatprep.subr.bf16.mxu0 %v680
    %808 = vmatpush1.bf16.msra.mxu0 %v679
    %809 = vmatprep.subr.bf16.mxu0 %v682
    %810 = vmatpush1.bf16.msra.mxu0 %v681
    %811 = vmatprep.subr.bf16.mxu0 %v684
    %812 = vmatpush1.bf16.msra.mxu0 %v683
    %813 = vmatprep.subr.bf16.mxu0 %v686
    %814 = vmatpush1.bf16.msra.mxu0 %v685
    %815 = vmatprep.mubr.bf16.mxu0 %v384
    %816 = vmatmul.mubr.bf16.gmra.mrb[0].mxu0 %v383
    %v817 = vpop.f32.mrb[0].mxu0
    %v818 = vadd.f32 %v456, %v817
    %v819 = vpop.f32.mrb[0].mxu0
    %v820 = vadd.f32 %v460, %v819
    %v821 = vpop.f32.mrb[0].mxu0
    %v822 = vpop.f32.mrb[0].mxu0
    %823 = vdwg.mxu0
    %824 = vmatprep.subr.bf16.mxu0 %v688
    %825 = vmatpush1.bf16.msra.mxu0 %v687
    %826 = vmatprep.subr.bf16.mxu0 %v690
    %827 = vmatpush1.bf16.msra.mxu0 %v689
    %828 = vmatprep.subr.bf16.mxu0 %v692
    %829 = vmatpush1.bf16.msra.mxu0 %v691
    %830 = vmatprep.subr.bf16.mxu0 %v694
    %831 = vmatpush1.bf16.msra.mxu0 %v693
    %832 = vmatprep.subr.bf16.mxu0 %v696
    %833 = vmatpush1.bf16.msra.mxu0 %v695
    %834 = vmatprep.subr.bf16.mxu0 %v698
    %835 = vmatpush1.bf16.msra.mxu0 %v697
    %836 = vmatprep.subr.bf16.mxu0 %v700
    %837 = vmatpush1.bf16.msra.mxu0 %v699
    %838 = vmatprep.subr.bf16.mxu0 %v702
    %839 = vmatpush1.bf16.msra.mxu0 %v701
    %840 = vmatprep.subr.bf16.mxu0 %v704
    %841 = vmatpush1.bf16.msra.mxu0 %v703
    %842 = vmatprep.subr.bf16.mxu0 %v706
    %843 = vmatpush1.bf16.msra.mxu0 %v705
    %844 = vmatprep.subr.bf16.mxu0 %v708
    %845 = vmatpush1.bf16.msra.mxu0 %v707
    %846 = vmatprep.subr.bf16.mxu0 %v710
    %847 = vmatpush1.bf16.msra.mxu0 %v709
    %848 = vmatprep.subr.bf16.mxu0 %v712
    %849 = vmatpush1.bf16.msra.mxu0 %v711
    %850 = vmatprep.subr.bf16.mxu0 %v714
    %851 = vmatpush1.bf16.msra.mxu0 %v713
    %852 = vmatprep.subr.bf16.mxu0 %v716
    %853 = vmatpush1.bf16.msra.mxu0 %v715
    %854 = vmatprep.subr.bf16.mxu0 %v718
    %855 = vmatpush1.bf16.msra.mxu0 %v717
    %856 = vmatprep.mubr.bf16.mxu0 %v386
    %857 = vmatmul.mubr.bf16.gmra.mrb[0].mxu0 %v385
    %v858 = vpop.f32.mrb[0].mxu0
    %v859 = vadd.f32 %v818, %v858
    %v860 = vpop.f32.mrb[0].mxu0
    %v861 = vadd.f32 %v820, %v860
    %v862 = vpop.f32.mrb[0].mxu0
    %v863 = vpop.f32.mrb[0].mxu0
    %864 = vdwg.mxu0
    %v865 = vmax.f32 %v859, 0.0
    %v866 = vmax.f32 %v861, 0.0
    %v867 = vpack.c.bf16 %v865, %v865
    %v868 = vpack.c.bf16 %v866, %v866
    %v869 = vld [vmem:[#allocation8] sm:$0xf]
    %v870 = vld [vmem:[#allocation8 + $0x4] sm:$0xf]
    %v871 = vld [vmem:[#allocation8 + $0x8] sm:$0xf]
    %v872 = vld [vmem:[#allocation8 + $0xc] sm:$0xf]
    %v873 = vld [vmem:[#allocation8 + $0x10] sm:$0xf]
    %v874 = vld [vmem:[#allocation8 + $0x14] sm:$0xf]
    %v875 = vld [vmem:[#allocation8 + $0x18] sm:$0xf]
    %v876 = vld [vmem:[#allocation8 + $0x1c] sm:$0xf]
    %v877 = vld [vmem:[#allocation8 + $0x20] sm:$0xf]
    %v878 = vld [vmem:[#allocation8 + $0x24] sm:$0xf]
    %v879 = vld [vmem:[#allocation8 + $0x28] sm:$0xf]
    %v880 = vld [vmem:[#allocation8 + $0x2c] sm:$0xf]
    %v881 = vld [vmem:[#allocation8 + $0x30] sm:$0xf]
    %v882 = vld [vmem:[#allocation8 + $0x34] sm:$0xf]
    %v883 = vld [vmem:[#allocation8 + $0x38] sm:$0xf]
    %v884 = vld [vmem:[#allocation8 + $0x3c] sm:$0xf]
    %v885 = vld [vmem:[#allocation8 + $0x40] sm:$0xf]
    %v886 = vld [vmem:[#allocation8 + $0x44] sm:$0xf]
    %v887 = vld [vmem:[#allocation8 + $0x48] sm:$0xf]
    %v888 = vld [vmem:[#allocation8 + $0x4c] sm:$0xf]
    %v889 = vld [vmem:[#allocation8 + $0x50] sm:$0xf]
    %v890 = vld [vmem:[#allocation8 + $0x54] sm:$0xf]
    %v891 = vld [vmem:[#allocation8 + $0x58] sm:$0xf]
    %v892 = vld [vmem:[#allocation8 + $0x5c] sm:$0xf]
    %v893 = vld [vmem:[#allocation8 + $0x60] sm:$0xf]
    %v894 = vld [vmem:[#allocation8 + $0x64] sm:$0xf]
    %v895 = vld [vmem:[#allocation8 + $0x68] sm:$0xf]
    %v896 = vld [vmem:[#allocation8 + $0x6c] sm:$0xf]
    %v897 = vld [vmem:[#allocation8 + $0x70] sm:$0xf]
    %v898 = vld [vmem:[#allocation8 + $0x74] sm:$0xf]
    %v899 = vld [vmem:[#allocation8 + $0x78] sm:$0xf]
    %v900 = vld [vmem:[#allocation8 + $0x7c] sm:$0xf]
    %v901 = vld [vmem:[%s6] sm:$0x1]
    %v903 = vlaneseq
    %v904 = vshrl.u32 %v903, 7
    %v905 = vsub.s32 0, %v904
    %v906 = vrot.slane %v901, %v905
    %v940 = vunpack.c.l.b16 %v869
    %v941 = vunpack.c.l.b16 %v870
    %v942 = vunpack.c.l.b16 %v871
    %v943 = vunpack.c.l.b16 %v872
    %v944 = vunpack.c.l.b16 %v873
    %v945 = vunpack.c.l.b16 %v874
    %v946 = vunpack.c.l.b16 %v875
    %v947 = vunpack.c.l.b16 %v876
    %v948 = vunpack.c.l.b16 %v877
    %v949 = vunpack.c.l.b16 %v878
    %v950 = vunpack.c.l.b16 %v879
    %v951 = vunpack.c.l.b16 %v880
    %v952 = vunpack.c.l.b16 %v881
    %v953 = vunpack.c.l.b16 %v882
    %v954 = vunpack.c.l.b16 %v883
    %v955 = vunpack.c.l.b16 %v884
    %v956 = vunpack.c.l.b16 %v885
    %v957 = vunpack.c.l.b16 %v886
    %v958 = vunpack.c.l.b16 %v887
    %v959 = vunpack.c.l.b16 %v888
    %v960 = vunpack.c.l.b16 %v889
    %v961 = vunpack.c.l.b16 %v890
    %v962 = vunpack.c.l.b16 %v891
    %v963 = vunpack.c.l.b16 %v892
    %v964 = vunpack.c.l.b16 %v893
    %v965 = vunpack.c.l.b16 %v894
    %v966 = vunpack.c.l.b16 %v895
    %v967 = vunpack.c.l.b16 %v896
    %v968 = vunpack.c.l.b16 %v897
    %v969 = vunpack.c.l.b16 %v898
    %v970 = vunpack.c.l.b16 %v899
    %v971 = vunpack.c.l.b16 %v900
    %v972 = vpack.c.b16 %v941, %v940
    %v973 = vpack.c.b16 %v943, %v942
    %v974 = vpack.c.b16 %v945, %v944
    %v975 = vpack.c.b16 %v947, %v946
    %v976 = vpack.c.b16 %v949, %v948
    %v977 = vpack.c.b16 %v951, %v950
    %v978 = vpack.c.b16 %v953, %v952
    %v979 = vpack.c.b16 %v955, %v954
    %v980 = vpack.c.b16 %v957, %v956
    %v981 = vpack.c.b16 %v959, %v958
    %v982 = vpack.c.b16 %v961, %v960
    %v983 = vpack.c.b16 %v963, %v962
    %v984 = vpack.c.b16 %v965, %v964
    %v985 = vpack.c.b16 %v967, %v966
    %v986 = vpack.c.b16 %v969, %v968
    %v987 = vpack.c.b16 %v971, %v970
    %1004 = vmatprep.subr.bf16.mxu0 0
    %1005 = vmatpush1.bf16.msra.mxu0 %v972
    %1006 = vmatprep.subr.bf16.mxu0 0
    %1007 = vmatpush1.bf16.msra.mxu0 %v973
    %1008 = vmatprep.subr.bf16.mxu0 0
    %1009 = vmatpush1.bf16.msra.mxu0 %v974
    %1010 = vmatprep.subr.bf16.mxu0 0
    %1011 = vmatpush1.bf16.msra.mxu0 %v975
    %1012 = vmatprep.subr.bf16.mxu0 0
    %1013 = vmatpush1.bf16.msra.mxu0 %v976
    %1014 = vmatprep.subr.bf16.mxu0 0
    %1015 = vmatpush1.bf16.msra.mxu0 %v977
    %1016 = vmatprep.subr.bf16.mxu0 0
    %1017 = vmatpush1.bf16.msra.mxu0 %v978
    %1018 = vmatprep.subr.bf16.mxu0 0
    %1019 = vmatpush1.bf16.msra.mxu0 %v979
    %1020 = vmatprep.subr.bf16.mxu0 0
    %1021 = vmatpush1.bf16.msra.mxu0 %v980
    %1022 = vmatprep.subr.bf16.mxu0 0
    %1023 = vmatpush1.bf16.msra.mxu0 %v981
    %1024 = vmatprep.subr.bf16.mxu0 0
    %1025 = vmatpush1.bf16.msra.mxu0 %v982
    %1026 = vmatprep.subr.bf16.mxu0 0
    %1027 = vmatpush1.bf16.msra.mxu0 %v983
    %1028 = vmatprep.subr.bf16.mxu0 0
    %1029 = vmatpush1.bf16.msra.mxu0 %v984
    %1030 = vmatprep.subr.bf16.mxu0 0
    %1031 = vmatpush1.bf16.msra.mxu0 %v985
    %1032 = vmatprep.subr.bf16.mxu0 0
    %1033 = vmatpush1.bf16.msra.mxu0 %v986
    %1034 = vmatprep.subr.bf16.mxu0 0
    %1035 = vmatpush1.bf16.msra.mxu0 %v987
    %1036 = vmatprep.mubr.bf16.mxu0 %v868
    %1037 = vmatmul.mubr.bf16.gmra.mrb[0].mxu0 %v867
    %v1038 = vpop.f32.mrb[0].mxu0
    %v1039 = vadd.f32 %v906, %v1038
    %v1040 = vpop.f32.mrb[0].mxu0
    %v1041 = vpop.f32.mrb[0].mxu0
    %v1042 = vpop.f32.mrb[0].mxu0
    %1043 = vdwg.mxu0
    %1044 = vst [vmem:[#allocation10] sm:$0x3] %v1039
    // Predicated region
    $region46: #{tpu_custom_call.1} parent=1 // pred_check
      _
    $region47: #{tpu_custom_call.1} parent=1 // pred_check_branch
      %1046 = sbr.rel (0) target = $region49
    $region48: #{tpu_custom_call.1} parent=1 // pred_region
      %s1048 = ssub.s32 32, 32
      %1049 = vsyncadd [#allocation4], %s1048
      %s1051 = sshll.u32 [#allocation10], 4
      %s1052 = int_to_ptr.vmem [resolvable:$true] %s1051
      %1054 = dma.vmem_to_hbm [thread:$0]  %s1052, 32, %s7, [#allocation4]
    $region49: #{tpu_custom_call.1} parent=1 // pred_fallthru
      _
    // Predicated region
    $region50: #{tpu_custom_call.1} parent=1 // pred_check
      _
    $region51: #{tpu_custom_call.1} parent=1 // pred_check_branch
      %1056 = sbr.rel (0) target = $region53
    $region52: #{tpu_custom_call.1} parent=1 // pred_region
      %1057 = dma.done [#allocation4], 32
    $region53: #{tpu_custom_call.1} parent=1 // pred_fallthru
      _
    %1058 = vsyncpa [#allocation3], 1
    %1059 = vsyncpa [#allocation6], 1
    %1060 = vsyncpa [#allocation9], 1
    %1061 = vsyncpa [#allocation4], 1

</llo_original>
